<compile_context>
chip_gen: v5e
topology: v5e:2x2
jax: 0.10.0
libtpu: 0.0.40
codegen_flags: <defaults>
</compile_context>

<pallas_src>
import functools

import jax
import jax.numpy as jnp
from jax.experimental import pallas as pl
from jax.experimental.pallas import tpu as pltpu

LEAKY_SLOPE = 0.02
LAYER_WIDTHS = (2 ** 6, 2 ** 8, 2 ** 8, 2 ** 6)  # 64, 256, 256, 64
LANE = 128


def _round_up(n, m):
    return ((n + m - 1) // m) * m


def _choose_tile(batch, tile_m):
    """Batch tile: multiple of 8, <= tile_m, and >= 2 grid steps when B > 8."""
    tile_m = max(8, _round_up(tile_m, 8))
    b8 = _round_up(max(batch, 1), 8)
    if b8 <= 8:
        return 8
    # Target at least 2 grid iterations so dimension_semantics=("parallel",)
    # can shard across both TensorCores on v7x; also bounds padding waste.
    half = _round_up((b8 + 1) // 2, 8)
    return min(tile_m, half)


def _encoder_client_emb_kernel(
    x_ref,
    w1_ref, b1_ref,
    w2_ref, b2_ref,
    w3_ref, b3_ref,
    w4_ref, b4_ref,
    w5_ref, b5_ref,
    o_ref,
):
    """Whole 5-layer MLP for one batch tile; all (padded) weights resident in VMEM."""

    def linear(h_bf16, w_ref, b_ref):
        # bf16 operands on the MXU, f32 accumulation; bias add in f32.
        z = jnp.dot(h_bf16, w_ref[...], preferred_element_type=jnp.float32)
        return z + b_ref[...]

    def leaky_relu_to_bf16(z_f32):
        # max(z, a*z) == LeakyReLU(a) for 0 < a < 1: 2 VPU ops instead of 3.
        return jnp.maximum(z_f32, LEAKY_SLOPE * z_f32).astype(jnp.bfloat16)

    h = x_ref[...]                                    # already bf16 off the DMA
    h = leaky_relu_to_bf16(linear(h, w1_ref, b1_ref))
    h = leaky_relu_to_bf16(linear(h, w2_ref, b2_ref))
    h = leaky_relu_to_bf16(linear(h, w3_ref, b3_ref))
    h = leaky_relu_to_bf16(linear(h, w4_ref, b4_ref))
    z = linear(h, w5_ref, b5_ref)                     # final layer, f32 accum
    o_ref[...] = jnp.tanh(z).astype(o_ref.dtype)      # tanh -> EUP


def prepare_params(params):
    """Pad hidden widths (64 -> 128) to lane-dense multiples of 128 and cast
    weights to bf16.  Call ONCE, outside the jitted hot path.

    The first layer's input dim and the last layer's output dim are left
    unpadded: the x / output blocks use the true feature width (full-array
    last dim), so the wrapper never materializes padded x nor slices a padded
    output.
    """
    n = len(params)
    prepped = []
    for idx, (w, b) in enumerate(params):
        fan_in, fan_out = w.shape
        pad_in = fan_in if idx == 0 else _round_up(fan_in, LANE)
        pad_out = fan_out if idx == n - 1 else _round_up(fan_out, LANE)
        wp = jnp.zeros((pad_in, pad_out), jnp.bfloat16)
        wp = wp.at[:fan_in, :fan_out].set(w.astype(jnp.bfloat16))
        bp = jnp.zeros((1, pad_out), jnp.float32)
        bp = bp.at[:, :fan_out].set(b.reshape(1, -1).astype(jnp.float32))
        prepped.append((wp, bp))
    return tuple(prepped)


def encoder_client_emb_forward(x, prepped_params, *, tile_m=512):
    """x: (B, data_dim) f32.  prepped_params: output of prepare_params().

    Returns (B, hidden_dim) f32.
    """
    B, data_dim = x.shape
    assert prepped_params[0][0].shape[0] == data_dim, "params/data_dim mismatch"
    hidden_dim = prepped_params[-1][0].shape[1]

    tile = _choose_tile(B, tile_m)
    b_pad = _round_up(B, tile)

    x_bf16 = x.astype(jnp.bfloat16)
    if b_pad != B:
        x_bf16 = jnp.pad(x_bf16, ((0, b_pad - B), (0, 0)))

    def const_spec(shape):
        # Full array, same block every grid step -> stays resident in VMEM.
        return pl.BlockSpec(shape, lambda i: (0, 0))

    in_specs = [pl.BlockSpec((tile, data_dim), lambda i: (i, 0))]
    flat_args = [x_bf16]
    for wp, bp in prepped_params:
        in_specs += [const_spec(wp.shape), const_spec(bp.shape)]
        flat_args += [wp, bp]

    out = pl.pallas_call(
        _encoder_client_emb_kernel,
        out_shape=jax.ShapeDtypeStruct((b_pad, hidden_dim), jnp.float32),
        grid_spec=pltpu.PrefetchScalarGridSpec(
            num_scalar_prefetch=0,
            grid=(b_pad // tile,),
            in_specs=in_specs,
            out_specs=pl.BlockSpec((tile, hidden_dim), lambda i: (i, 0)),
        ),
        compiler_params=pltpu.CompilerParams(
            dimension_semantics=("parallel",),  # shards batch tiles across TCs
        ),
    )(*flat_args)

    if b_pad != B:
        out = out[:B]
    return out


def init_params(key, data_dim, hidden_dim):
    """PyTorch nn.Linear-style init; weights stored as (in, out), f32."""
    dims = [data_dim, *LAYER_WIDTHS, hidden_dim]
    params = []
    for idx, (fan_in, fan_out) in enumerate(zip(dims[:-1], dims[1:])):
        kw, kb = jax.random.split(jax.random.fold_in(key, idx))
        bound = 1.0 / float(fan_in) ** 0.5
        w = jax.random.uniform(kw, (fan_in, fan_out), jnp.float32, -bound, bound)
        b = jax.random.uniform(kb, (1, fan_out), jnp.float32, -bound, bound)
        params.append((w, b))
    return params


def reference_forward(x, params):
    """Pure-JAX f32 reference with the exact module semantics."""
    h = x
    n = len(params)
    for i, (w, b) in enumerate(params):
        h = h @ w + b
        if i < n - 1:
            h = jnp.where(h >= 0.0, h, LEAKY_SLOPE * h)
        else:
            h = jnp.tanh(h)
    return h


if __name__ == "__main__":
    key = jax.random.PRNGKey(0)
    data_dim = 32
    hidden_dim = 32
    batch = 16

    kx, kp = jax.random.split(key)
    x = jax.random.normal(kx, (batch, data_dim), jnp.float32)
    params = init_params(kp, data_dim, hidden_dim)

    # Pad/cast weights ONCE, outside the jitted hot path.
    prepped = prepare_params(params)

    fwd = jax.jit(functools.partial(encoder_client_emb_forward, tile_m=512))
    out = jax.block_until_ready(fwd(x, prepped))

    ref = reference_forward(x, params)
    assert out.shape == (batch, hidden_dim)
    # bf16 matmul operands with f32 accumulation: slightly looser tolerance vs f32 ref.
    assert jnp.allclose(out, ref, atol=2e-2, rtol=0.0), "mismatch vs reference"

    print("KERNEL_OK")
</pallas_src>

<mosaic_0001>
module attributes {stable_mosaic.version = 11 : i64} {
  func.func @_encoder_client_emb_kernel(%arg0: i32, %arg1: memref<8x32xbf16, #tpu.memory_space<vmem>>, %arg2: memref<32x128xbf16, #tpu.memory_space<vmem>>, %arg3: memref<1x128xf32, #tpu.memory_space<vmem>>, %arg4: memref<128x256xbf16, #tpu.memory_space<vmem>>, %arg5: memref<1x256xf32, #tpu.memory_space<vmem>>, %arg6: memref<256x256xbf16, #tpu.memory_space<vmem>>, %arg7: memref<1x256xf32, #tpu.memory_space<vmem>>, %arg8: memref<256x128xbf16, #tpu.memory_space<vmem>>, %arg9: memref<1x128xf32, #tpu.memory_space<vmem>>, %arg10: memref<128x32xbf16, #tpu.memory_space<vmem>>, %arg11: memref<1x32xf32, #tpu.memory_space<vmem>>, %arg12: memref<8x32xf32, #tpu.memory_space<vmem>>) attributes {dimension_semantics = [#tpu.dimension_semantics<parallel>], iteration_bounds = array<i64: 2>, scalar_prefetch = 0 : i64, scratch_operands = 0 : i64, tpu.core_type = #tpu.core_type<tc>, window_params = [{transform_indices = @transform_0, window_bounds = array<i64: 8, 32>}, {pipeline_mode = #tpu.pipeline_mode<synchronous>, transform_indices = @transform_1, window_bounds = array<i64: 32, 128>}, {pipeline_mode = #tpu.pipeline_mode<synchronous>, transform_indices = @transform_2, window_bounds = array<i64: 1, 128>}, {pipeline_mode = #tpu.pipeline_mode<synchronous>, transform_indices = @transform_3, window_bounds = array<i64: 128, 256>}, {pipeline_mode = #tpu.pipeline_mode<synchronous>, transform_indices = @transform_4, window_bounds = array<i64: 1, 256>}, {pipeline_mode = #tpu.pipeline_mode<synchronous>, transform_indices = @transform_5, window_bounds = array<i64: 256, 256>}, {pipeline_mode = #tpu.pipeline_mode<synchronous>, transform_indices = @transform_6, window_bounds = array<i64: 1, 256>}, {pipeline_mode = #tpu.pipeline_mode<synchronous>, transform_indices = @transform_7, window_bounds = array<i64: 256, 128>}, {pipeline_mode = #tpu.pipeline_mode<synchronous>, transform_indices = @transform_8, window_bounds = array<i64: 1, 128>}, {pipeline_mode = #tpu.pipeline_mode<synchronous>, transform_indices = @transform_9, window_bounds = array<i64: 128, 32>}, {pipeline_mode = #tpu.pipeline_mode<synchronous>, transform_indices = @transform_10, window_bounds = array<i64: 1, 32>}, {transform_indices = @transform_11, window_bounds = array<i64: 8, 32>}]} {
    %c0 = arith.constant 0 : index
    %c0_0 = arith.constant 0 : index
    %0 = vector.load %arg1[%c0, %c0_0] : memref<8x32xbf16, #tpu.memory_space<vmem>>, vector<8x32xbf16>
    %c0_1 = arith.constant 0 : index
    %c0_2 = arith.constant 0 : index
    %1 = vector.load %arg2[%c0_1, %c0_2] : memref<32x128xbf16, #tpu.memory_space<vmem>>, vector<32x128xbf16>
    %cst = arith.constant dense<0.000000e+00> : vector<8x128xf32>
    %2 = tpu.matmul %0, %1, %cst {dimension_numbers = #tpu.dot_dimension_numbers<[1], [0], [0], [1], [0, 0, 1, 1], [], []>} : vector<8x32xbf16>, vector<32x128xbf16>, vector<8x128xf32> -> vector<8x128xf32>
    %c0_3 = arith.constant 0 : index
    %c0_4 = arith.constant 0 : index
    %3 = vector.load %arg3[%c0_3, %c0_4] : memref<1x128xf32, #tpu.memory_space<vmem>>, vector<1x128xf32>
    %4 = vector.broadcast %3 : vector<1x128xf32> to vector<8x128xf32>
    %5 = arith.addf %2, %4 : vector<8x128xf32>
    %cst_5 = arith.constant 2.000000e-02 : f32
    %6 = vector.broadcast %cst_5 : f32 to vector<8x128xf32>
    %7 = arith.mulf %6, %5 : vector<8x128xf32>
    %8 = arith.maximumf %5, %7 : vector<8x128xf32>
    %9 = arith.truncf %8 : vector<8x128xf32> to vector<8x128xbf16>
    %c0_6 = arith.constant 0 : index
    %c0_7 = arith.constant 0 : index
    %10 = vector.load %arg4[%c0_6, %c0_7] : memref<128x256xbf16, #tpu.memory_space<vmem>>, vector<128x256xbf16>
    %cst_8 = arith.constant dense<0.000000e+00> : vector<8x256xf32>
    %11 = tpu.matmul %9, %10, %cst_8 {dimension_numbers = #tpu.dot_dimension_numbers<[1], [0], [0], [1], [0, 0, 1, 1], [], []>} : vector<8x128xbf16>, vector<128x256xbf16>, vector<8x256xf32> -> vector<8x256xf32>
    %c0_9 = arith.constant 0 : index
    %c0_10 = arith.constant 0 : index
    %12 = vector.load %arg5[%c0_9, %c0_10] : memref<1x256xf32, #tpu.memory_space<vmem>>, vector<1x256xf32>
    %13 = vector.broadcast %12 : vector<1x256xf32> to vector<8x256xf32>
    %14 = arith.addf %11, %13 : vector<8x256xf32>
    %cst_11 = arith.constant 2.000000e-02 : f32
    %15 = vector.broadcast %cst_11 : f32 to vector<8x256xf32>
    %16 = arith.mulf %15, %14 : vector<8x256xf32>
    %17 = arith.maximumf %14, %16 : vector<8x256xf32>
    %18 = arith.truncf %17 : vector<8x256xf32> to vector<8x256xbf16>
    %c0_12 = arith.constant 0 : index
    %c0_13 = arith.constant 0 : index
    %19 = vector.load %arg6[%c0_12, %c0_13] : memref<256x256xbf16, #tpu.memory_space<vmem>>, vector<256x256xbf16>
    %cst_14 = arith.constant dense<0.000000e+00> : vector<8x256xf32>
    %20 = tpu.matmul %18, %19, %cst_14 {dimension_numbers = #tpu.dot_dimension_numbers<[1], [0], [0], [1], [0, 0, 1, 1], [], []>} : vector<8x256xbf16>, vector<256x256xbf16>, vector<8x256xf32> -> vector<8x256xf32>
    %c0_15 = arith.constant 0 : index
    %c0_16 = arith.constant 0 : index
    %21 = vector.load %arg7[%c0_15, %c0_16] : memref<1x256xf32, #tpu.memory_space<vmem>>, vector<1x256xf32>
    %22 = vector.broadcast %21 : vector<1x256xf32> to vector<8x256xf32>
    %23 = arith.addf %20, %22 : vector<8x256xf32>
    %cst_17 = arith.constant 2.000000e-02 : f32
    %24 = vector.broadcast %cst_17 : f32 to vector<8x256xf32>
    %25 = arith.mulf %24, %23 : vector<8x256xf32>
    %26 = arith.maximumf %23, %25 : vector<8x256xf32>
    %27 = arith.truncf %26 : vector<8x256xf32> to vector<8x256xbf16>
    %c0_18 = arith.constant 0 : index
    %c0_19 = arith.constant 0 : index
    %28 = vector.load %arg8[%c0_18, %c0_19] : memref<256x128xbf16, #tpu.memory_space<vmem>>, vector<256x128xbf16>
    %cst_20 = arith.constant dense<0.000000e+00> : vector<8x128xf32>
    %29 = tpu.matmul %27, %28, %cst_20 {dimension_numbers = #tpu.dot_dimension_numbers<[1], [0], [0], [1], [0, 0, 1, 1], [], []>} : vector<8x256xbf16>, vector<256x128xbf16>, vector<8x128xf32> -> vector<8x128xf32>
    %c0_21 = arith.constant 0 : index
    %c0_22 = arith.constant 0 : index
    %30 = vector.load %arg9[%c0_21, %c0_22] : memref<1x128xf32, #tpu.memory_space<vmem>>, vector<1x128xf32>
    %31 = vector.broadcast %30 : vector<1x128xf32> to vector<8x128xf32>
    %32 = arith.addf %29, %31 : vector<8x128xf32>
    %cst_23 = arith.constant 2.000000e-02 : f32
    %33 = vector.broadcast %cst_23 : f32 to vector<8x128xf32>
    %34 = arith.mulf %33, %32 : vector<8x128xf32>
    %35 = arith.maximumf %32, %34 : vector<8x128xf32>
    %36 = arith.truncf %35 : vector<8x128xf32> to vector<8x128xbf16>
    %c0_24 = arith.constant 0 : index
    %c0_25 = arith.constant 0 : index
    %37 = vector.load %arg10[%c0_24, %c0_25] : memref<128x32xbf16, #tpu.memory_space<vmem>>, vector<128x32xbf16>
    %cst_26 = arith.constant dense<0.000000e+00> : vector<8x32xf32>
    %38 = tpu.matmul %36, %37, %cst_26 {dimension_numbers = #tpu.dot_dimension_numbers<[1], [0], [0], [1], [0, 0, 1, 1], [], []>} : vector<8x128xbf16>, vector<128x32xbf16>, vector<8x32xf32> -> vector<8x32xf32>
    %c0_27 = arith.constant 0 : index
    %c0_28 = arith.constant 0 : index
    %39 = vector.load %arg11[%c0_27, %c0_28] : memref<1x32xf32, #tpu.memory_space<vmem>>, vector<1x32xf32>
    %40 = vector.broadcast %39 : vector<1x32xf32> to vector<8x32xf32>
    %41 = arith.addf %38, %40 : vector<8x32xf32>
    %42 = math.tanh %41 : vector<8x32xf32>
    %c0_29 = arith.constant 0 : index
    %c0_30 = arith.constant 0 : index
    %43 = vector.load %arg12[%c0_29, %c0_30] : memref<8x32xf32, #tpu.memory_space<vmem>>, vector<8x32xf32>
    tpu.vector_store %arg12[%c0_29, %c0_30], %42 {strides = array<i32>} : memref<8x32xf32, #tpu.memory_space<vmem>>, vector<8x32xf32>,
    return
  }
  func.func @transform_0(%arg0: i32) -> (i32, i32) {
    %c0_i32 = arith.constant 0 : i32
    %c0_i32_0 = arith.constant 0 : i32
    return %arg0, %c0_i32 : i32, i32
  }
  func.func @transform_1(%arg0: i32) -> (i32, i32) {
    %c0_i32 = arith.constant 0 : i32
    %c0_i32_0 = arith.constant 0 : i32
    %c0_i32_1 = arith.constant 0 : i32
    return %c0_i32, %c0_i32_0 : i32, i32
  }
  func.func @transform_2(%arg0: i32) -> (i32, i32) {
    %c0_i32 = arith.constant 0 : i32
    %c0_i32_0 = arith.constant 0 : i32
    %c0_i32_1 = arith.constant 0 : i32
    return %c0_i32, %c0_i32_0 : i32, i32
  }
  func.func @transform_3(%arg0: i32) -> (i32, i32) {
    %c0_i32 = arith.constant 0 : i32
    %c0_i32_0 = arith.constant 0 : i32
    %c0_i32_1 = arith.constant 0 : i32
    return %c0_i32, %c0_i32_0 : i32, i32
  }
  func.func @transform_4(%arg0: i32) -> (i32, i32) {
    %c0_i32 = arith.constant 0 : i32
    %c0_i32_0 = arith.constant 0 : i32
    %c0_i32_1 = arith.constant 0 : i32
    return %c0_i32, %c0_i32_0 : i32, i32
  }
  func.func @transform_5(%arg0: i32) -> (i32, i32) {
    %c0_i32 = arith.constant 0 : i32
    %c0_i32_0 = arith.constant 0 : i32
    %c0_i32_1 = arith.constant 0 : i32
    return %c0_i32, %c0_i32_0 : i32, i32
  }
  func.func @transform_6(%arg0: i32) -> (i32, i32) {
    %c0_i32 = arith.constant 0 : i32
    %c0_i32_0 = arith.constant 0 : i32
    %c0_i32_1 = arith.constant 0 : i32
    return %c0_i32, %c0_i32_0 : i32, i32
  }
  func.func @transform_7(%arg0: i32) -> (i32, i32) {
    %c0_i32 = arith.constant 0 : i32
    %c0_i32_0 = arith.constant 0 : i32
    %c0_i32_1 = arith.constant 0 : i32
    return %c0_i32, %c0_i32_0 : i32, i32
  }
  func.func @transform_8(%arg0: i32) -> (i32, i32) {
    %c0_i32 = arith.constant 0 : i32
    %c0_i32_0 = arith.constant 0 : i32
    %c0_i32_1 = arith.constant 0 : i32
    return %c0_i32, %c0_i32_0 : i32, i32
  }
  func.func @transform_9(%arg0: i32) -> (i32, i32) {
    %c0_i32 = arith.constant 0 : i32
    %c0_i32_0 = arith.constant 0 : i32
    %c0_i32_1 = arith.constant 0 : i32
    return %c0_i32, %c0_i32_0 : i32, i32
  }
  func.func @transform_10(%arg0: i32) -> (i32, i32) {
    %c0_i32 = arith.constant 0 : i32
    %c0_i32_0 = arith.constant 0 : i32
    %c0_i32_1 = arith.constant 0 : i32
    return %c0_i32, %c0_i32_0 : i32, i32
  }
  func.func @transform_11(%arg0: i32) -> (i32, i32) {
    %c0_i32 = arith.constant 0 : i32
    %c0_i32_0 = arith.constant 0 : i32
    return %arg0, %c0_i32 : i32, i32
  }
}

</mosaic_0001>

<llo_original>
// kernel: encoder_client_emb_forward.1
$region0: #{encoder_client_emb_forward.1}
  #allocation0 [shape = 'u32[]', space=smem, size = 0x4, offset = 0x4, fixed_abs, tag = 'smem constant byte address 0x4 - core index']
  #allocation1 [shape = 'u32[72,128]{1,0:T(1,128)}', space=vmem, size = 0x9000, scoped, tag = 'internal scratch']
  %s0 = inlined_call_operand.vmem [shape: bf16[16,32], index: 0, kind: input, shape index: {}]
  %s1 = inlined_call_operand.vmem [shape: bf16[32,128], index: 1, kind: input, shape index: {}]
  %s2 = inlined_call_operand.vmem [shape: f32[1,128], index: 2, kind: input, shape index: {}]
  %s3 = inlined_call_operand.hbm [shape: bf16[128,256], index: 3, kind: input, shape index: {}]
  %s4 = inlined_call_operand.vmem [shape: f32[1,256], index: 4, kind: input, shape index: {}]
  %s5 = inlined_call_operand.hbm [shape: bf16[256,256], index: 5, kind: input, shape index: {}]
  %s6 = inlined_call_operand.vmem [shape: f32[1,256], index: 6, kind: input, shape index: {}]
  %s7 = inlined_call_operand.hbm [shape: bf16[256,128], index: 7, kind: input, shape index: {}]
  %s8 = inlined_call_operand.vmem [shape: f32[1,128], index: 8, kind: input, shape index: {}]
  %s9 = inlined_call_operand.vmem [shape: bf16[128,32], index: 9, kind: input, shape index: {}]
  %s10 = inlined_call_operand.vmem [shape: f32[1,32], index: 10, kind: input, shape index: {}]
  %s11 = inlined_call_operand.hbm [shape: f32[16,32], index: 11, kind: output, shape index: {}]
  %s12 = sld [smem:[#allocation0]]
  $region89: #{encoder_client_emb_forward.1} parent=0
    _
  %s14 = ssub.s32 1, %s12
  %s15 = scalar_select 0, %s14, %s12
  $region1: #{encoder_client_emb_forward.1} parent=0
    #allocation2 [shape = 'u8[65536]{0}', space=vmem, size = 0x10000, scoped, tag = 'input window, operand 3, single buffered']
    #allocation3 [shape = 's32[2]{0}', space=sflag, size = 0x8, scoped, tag = 'scoped memory for encoder_client_emb_forward.1']
    #allocation4 [shape = 's32[2]{0}', space=sflag, size = 0x8, scoped, tag = 'scoped memory for encoder_client_emb_forward.1']
    #allocation5 [shape = 'u8[131072]{0}', space=vmem, size = 0x20000, scoped, tag = 'input window, operand 5, single buffered']
    #allocation6 [shape = 's32[1]{0}', space=sflag, size = 0x4, scoped, tag = 'scoped memory for encoder_client_emb_forward.1']
    #allocation7 [shape = 'u8[65536]{0}', space=vmem, size = 0x10000, scoped, tag = 'input window, operand 7, single buffered']
    #allocation8 [shape = 'u8[8192]{0}', space=vmem, size = 0x2000, scoped, tag = 'output window, operand 0']
    %16 = vsyncpa [#allocation3], 0
    %17 = vsyncpa [#allocation6], 0
    %18 = vsyncpa [#allocation4], 0
    %s19 = scalar_lea.sflag [#allocation4], 1
    %20 = vsyncpa %s19, 0
    loop: start=0, step=1, limit=4
    $region2: #{encoder_client_emb_forward.1} parent=1 // loop_pre_header
      _
    $region3: #{encoder_client_emb_forward.1} parent=1 // loop_header
      %s22 = sphi 0, %s26
      %p23 = scmp.ge.s32.totalorder %s22, 4
      %s32 = sphi 0, %s34
      %s35 = sphi 0, %s32
      %s36 = sphi 0, %s35
      %s52 = sphi 0, %s36
      %s56 = sphi 0, %s56
      %s58 = sphi 0, %s56
      %s59 = sphi 0, %s58
      %s73 = sphi 0, %s59
      %s77 = sphi 0, %s77
      %s79 = sphi 0, %s77
      %s80 = sphi 0, %s79
      %s94 = sphi 0, %s80
      %s98 = sphi 0, %s98
      %s100 = sphi 0, %s98
      %s101 = sphi 0, %s100
      %s115 = sphi 0, %s101
      %s119 = sphi 0, %s119
      %s121 = sphi 0, %s119
      %s122 = sphi 0, %s121
      %s136 = sphi 0, %s122
      %s140 = sphi 0, %s140
      %s142 = sphi 0, %s140
      %s143 = sphi 0, %s142
      %s157 = sphi 0, %s143
      %s161 = sphi 0, %s161
      %s163 = sphi 0, %s161
      %s164 = sphi 0, %s163
      %s178 = sphi 0, %s164
      %s182 = sphi 0, %s182
      %s184 = sphi 0, %s182
      %s185 = sphi 0, %s184
      %s199 = sphi 0, %s185
      %s203 = sphi 0, %s203
      %s205 = sphi 0, %s203
      %s206 = sphi 0, %s205
      %s220 = sphi 0, %s206
      %s224 = sphi 0, %s224
      %s226 = sphi 0, %s224
      %s227 = sphi 0, %s226
      %s241 = sphi 0, %s227
      %s245 = sphi 0, %s245
      %s247 = sphi 0, %s245
      %s248 = sphi 0, %s247
      %s262 = sphi 0, %s248
      %s268 = sphi 0, %s270
      %s271 = sphi 0, %s268
      %s272 = sphi 0, %s271
      %s288 = sphi 0, %s272
    $region4: #{encoder_client_emb_forward.1} parent=1 // loop_header_branch
      %25 = sbr.rel (%p23) target = $region8
    $region5: #{encoder_client_emb_forward.1} parent=1 // loop_body
      %s27 = ssub.s32 %s22, 1
      %s28 = ssub.s32 %s22, 2
      %s29 = sadd.s32 %s22, 1
      %s30 = ssub.s32 %s22, %s29
      %p31 = scmp.eq.s32.totalorder %s30, 0
      %s33 = sadd.s32 %s32, 1
      %s34 = scalar_select %p31, %s32, %s33
      %p37 = pneg %p31
      %p38 = scmp.eq.s32.totalorder %s22, 1
      %p39 = por %p37, %p38
      %p40 = scmp.ne.s32.totalorder %s32, %s35
      %p41 = scmp.eq.s32.totalorder %s22, 0
      %p42 = por %p40, %p41
      %p43 = scmp.ne.s32.totalorder %s32, %s35
      %p44 = scmp.eq.s32.totalorder %s27, 1
      %p45 = por %p43, %p44
      %p46 = scmp.ne.s32.totalorder %s35, %s36
      %p47 = scmp.eq.s32.totalorder %s27, 0
      %p48 = por %p46, %p47
      %p49 = scmp.ne.s32.totalorder %s35, %s36
      %p50 = scmp.eq.s32.totalorder %s28, 1
      %p51 = por %p49, %p50
      %p53 = scmp.ne.s32.totalorder %s36, %s52
      %p54 = scmp.eq.s32.totalorder %s28, 0
      %p55 = por %p53, %p54
      %s57 = sadd.s32 %s56, 1
      %p60 = scmp.eq.s32.totalorder %s22, 1
      %p61 = scmp.ne.s32.totalorder %s56, %s58
      %p62 = scmp.eq.s32.totalorder %s22, 0
      %p63 = por %p61, %p62
      %p64 = scmp.ne.s32.totalorder %s56, %s58
      %p65 = scmp.eq.s32.totalorder %s27, 1
      %p66 = por %p64, %p65
      %p67 = scmp.ne.s32.totalorder %s58, %s59
      %p68 = scmp.eq.s32.totalorder %s27, 0
      %p69 = por %p67, %p68
      %p70 = scmp.ne.s32.totalorder %s58, %s59
      %p71 = scmp.eq.s32.totalorder %s28, 1
      %p72 = por %p70, %p71
      %p74 = scmp.ne.s32.totalorder %s59, %s73
      %p75 = scmp.eq.s32.totalorder %s28, 0
      %p76 = por %p74, %p75
      %s78 = sadd.s32 %s77, 1
      %p81 = scmp.eq.s32.totalorder %s22, 1
      %p82 = scmp.ne.s32.totalorder %s77, %s79
      %p83 = scmp.eq.s32.totalorder %s22, 0
      %p84 = por %p82, %p83
      %p85 = scmp.ne.s32.totalorder %s77, %s79
      %p86 = scmp.eq.s32.totalorder %s27, 1
      %p87 = por %p85, %p86
      %p88 = scmp.ne.s32.totalorder %s79, %s80
      %p89 = scmp.eq.s32.totalorder %s27, 0
      %p90 = por %p88, %p89
      %p91 = scmp.ne.s32.totalorder %s79, %s80
      %p92 = scmp.eq.s32.totalorder %s28, 1
      %p93 = por %p91, %p92
      %p95 = scmp.ne.s32.totalorder %s80, %s94
      %p96 = scmp.eq.s32.totalorder %s28, 0
      %p97 = por %p95, %p96
      %s99 = sadd.s32 %s98, 1
      %p102 = scmp.eq.s32.totalorder %s22, 1
      %p103 = scmp.ne.s32.totalorder %s98, %s100
      %p104 = scmp.eq.s32.totalorder %s22, 0
      %p105 = por %p103, %p104
      %p106 = scmp.ne.s32.totalorder %s98, %s100
      %p107 = scmp.eq.s32.totalorder %s27, 1
      %p108 = por %p106, %p107
      %p109 = scmp.ne.s32.totalorder %s100, %s101
      %p110 = scmp.eq.s32.totalorder %s27, 0
      %p111 = por %p109, %p110
      %p112 = scmp.ne.s32.totalorder %s100, %s101
      %p113 = scmp.eq.s32.totalorder %s28, 1
      %p114 = por %p112, %p113
      %p116 = scmp.ne.s32.totalorder %s101, %s115
      %p117 = scmp.eq.s32.totalorder %s28, 0
      %p118 = por %p116, %p117
      %s120 = sadd.s32 %s119, 1
      %p123 = scmp.eq.s32.totalorder %s22, 1
      %p124 = scmp.ne.s32.totalorder %s119, %s121
      %p125 = scmp.eq.s32.totalorder %s22, 0
      %p126 = por %p124, %p125
      %p127 = scmp.ne.s32.totalorder %s119, %s121
      %p128 = scmp.eq.s32.totalorder %s27, 1
      %p129 = por %p127, %p128
      %p130 = scmp.ne.s32.totalorder %s121, %s122
      %p131 = scmp.eq.s32.totalorder %s27, 0
      %p132 = por %p130, %p131
      %p133 = scmp.ne.s32.totalorder %s121, %s122
      %p134 = scmp.eq.s32.totalorder %s28, 1
      %p135 = por %p133, %p134
      %p137 = scmp.ne.s32.totalorder %s122, %s136
      %p138 = scmp.eq.s32.totalorder %s28, 0
      %p139 = por %p137, %p138
      %s141 = sadd.s32 %s140, 1
      %p144 = scmp.eq.s32.totalorder %s22, 1
      %p145 = scmp.ne.s32.totalorder %s140, %s142
      %p146 = scmp.eq.s32.totalorder %s22, 0
      %p147 = por %p145, %p146
      %p148 = scmp.ne.s32.totalorder %s140, %s142
      %p149 = scmp.eq.s32.totalorder %s27, 1
      %p150 = por %p148, %p149
      %p151 = scmp.ne.s32.totalorder %s142, %s143
      %p152 = scmp.eq.s32.totalorder %s27, 0
      %p153 = por %p151, %p152
      %p154 = scmp.ne.s32.totalorder %s142, %s143
      %p155 = scmp.eq.s32.totalorder %s28, 1
      %p156 = por %p154, %p155
      %p158 = scmp.ne.s32.totalorder %s143, %s157
      %p159 = scmp.eq.s32.totalorder %s28, 0
      %p160 = por %p158, %p159
      %s162 = sadd.s32 %s161, 1
      %p165 = scmp.eq.s32.totalorder %s22, 1
      %p166 = scmp.ne.s32.totalorder %s161, %s163
      %p167 = scmp.eq.s32.totalorder %s22, 0
      %p168 = por %p166, %p167
      %p169 = scmp.ne.s32.totalorder %s161, %s163
      %p170 = scmp.eq.s32.totalorder %s27, 1
      %p171 = por %p169, %p170
      %p172 = scmp.ne.s32.totalorder %s163, %s164
      %p173 = scmp.eq.s32.totalorder %s27, 0
      %p174 = por %p172, %p173
      %p175 = scmp.ne.s32.totalorder %s163, %s164
      %p176 = scmp.eq.s32.totalorder %s28, 1
      %p177 = por %p175, %p176
      %p179 = scmp.ne.s32.totalorder %s164, %s178
      %p180 = scmp.eq.s32.totalorder %s28, 0
      %p181 = por %p179, %p180
      %s183 = sadd.s32 %s182, 1
      %p186 = scmp.eq.s32.totalorder %s22, 1
      %p187 = scmp.ne.s32.totalorder %s182, %s184
      %p188 = scmp.eq.s32.totalorder %s22, 0
      %p189 = por %p187, %p188
      %p190 = scmp.ne.s32.totalorder %s182, %s184
      %p191 = scmp.eq.s32.totalorder %s27, 1
      %p192 = por %p190, %p191
      %p193 = scmp.ne.s32.totalorder %s184, %s185
      %p194 = scmp.eq.s32.totalorder %s27, 0
      %p195 = por %p193, %p194
      %p196 = scmp.ne.s32.totalorder %s184, %s185
      %p197 = scmp.eq.s32.totalorder %s28, 1
      %p198 = por %p196, %p197
      %p200 = scmp.ne.s32.totalorder %s185, %s199
      %p201 = scmp.eq.s32.totalorder %s28, 0
      %p202 = por %p200, %p201
      %s204 = sadd.s32 %s203, 1
      %p207 = scmp.eq.s32.totalorder %s22, 1
      %p208 = scmp.ne.s32.totalorder %s203, %s205
      %p209 = scmp.eq.s32.totalorder %s22, 0
      %p210 = por %p208, %p209
      %p211 = scmp.ne.s32.totalorder %s203, %s205
      %p212 = scmp.eq.s32.totalorder %s27, 1
      %p213 = por %p211, %p212
      %p214 = scmp.ne.s32.totalorder %s205, %s206
      %p215 = scmp.eq.s32.totalorder %s27, 0
      %p216 = por %p214, %p215
      %p217 = scmp.ne.s32.totalorder %s205, %s206
      %p218 = scmp.eq.s32.totalorder %s28, 1
      %p219 = por %p217, %p218
      %p221 = scmp.ne.s32.totalorder %s206, %s220
      %p222 = scmp.eq.s32.totalorder %s28, 0
      %p223 = por %p221, %p222
      %s225 = sadd.s32 %s224, 1
      %p228 = scmp.eq.s32.totalorder %s22, 1
      %p229 = scmp.ne.s32.totalorder %s224, %s226
      %p230 = scmp.eq.s32.totalorder %s22, 0
      %p231 = por %p229, %p230
      %p232 = scmp.ne.s32.totalorder %s224, %s226
      %p233 = scmp.eq.s32.totalorder %s27, 1
      %p234 = por %p232, %p233
      %p235 = scmp.ne.s32.totalorder %s226, %s227
      %p236 = scmp.eq.s32.totalorder %s27, 0
      %p237 = por %p235, %p236
      %p238 = scmp.ne.s32.totalorder %s226, %s227
      %p239 = scmp.eq.s32.totalorder %s28, 1
      %p240 = por %p238, %p239
      %p242 = scmp.ne.s32.totalorder %s227, %s241
      %p243 = scmp.eq.s32.totalorder %s28, 0
      %p244 = por %p242, %p243
      %s246 = sadd.s32 %s245, 1
      %p249 = scmp.eq.s32.totalorder %s22, 1
      %p250 = scmp.ne.s32.totalorder %s245, %s247
      %p251 = scmp.eq.s32.totalorder %s22, 0
      %p252 = por %p250, %p251
      %p253 = scmp.ne.s32.totalorder %s245, %s247
      %p254 = scmp.eq.s32.totalorder %s27, 1
      %p255 = por %p253, %p254
      %p256 = scmp.ne.s32.totalorder %s247, %s248
      %p257 = scmp.eq.s32.totalorder %s27, 0
      %p258 = por %p256, %p257
      %p259 = scmp.ne.s32.totalorder %s247, %s248
      %p260 = scmp.eq.s32.totalorder %s28, 1
      %p261 = por %p259, %p260
      %p263 = scmp.ne.s32.totalorder %s248, %s262
      %p264 = scmp.eq.s32.totalorder %s28, 0
      %p265 = por %p263, %p264
      %s266 = ssub.s32 %s22, %s29
      %p267 = scmp.eq.s32.totalorder %s266, 0
      %s269 = sadd.s32 %s268, 1
      %s270 = scalar_select %p267, %s268, %s269
      %p273 = pneg %p267
      %p274 = scmp.eq.s32.totalorder %s22, 1
      %p275 = por %p273, %p274
      %p276 = scmp.ne.s32.totalorder %s268, %s271
      %p277 = scmp.eq.s32.totalorder %s22, 0
      %p278 = por %p276, %p277
      %p279 = scmp.ne.s32.totalorder %s268, %s271
      %p280 = scmp.eq.s32.totalorder %s27, 1
      %p281 = por %p279, %p280
      %p282 = scmp.ne.s32.totalorder %s271, %s272
      %p283 = scmp.eq.s32.totalorder %s27, 0
      %p284 = por %p282, %p283
      %p285 = scmp.ne.s32.totalorder %s271, %s272
      %p286 = scmp.eq.s32.totalorder %s28, 1
      %p287 = por %p285, %p286
      %p289 = scmp.ne.s32.totalorder %s272, %s288
      %p290 = scmp.eq.s32.totalorder %s28, 0
      %p291 = por %p289, %p290
      %p292 = scmp.le.s32.totalorder 1, %s22
      %p293 = scmp.lt.s32.totalorder %s22, 3
      %p294 = pnand %p292, %p293
      %p295 = pneg %p294
      // Predicated region
      $region9: #{encoder_client_emb_forward.1} parent=5 // pred_check
        _
      $region10: #{encoder_client_emb_forward.1} parent=5 // pred_check_branch
        %297 = sbr.rel (%p294) target = $region12
      $region11: #{encoder_client_emb_forward.1} parent=5 // pred_region
        %s298 = ssub.s32 %s22, 1
        // Predicated region
        $region13: #{encoder_client_emb_forward.1} parent=11 // pred_check
          %p299 = pneg %p69
        $region14: #{encoder_client_emb_forward.1} parent=11 // pred_check_branch
          %301 = sbr.rel (%p299) target = $region16
        $region15: #{encoder_client_emb_forward.1} parent=11 // pred_region
          _
        $region16: #{encoder_client_emb_forward.1} parent=11 // pred_fallthru
          _
        // Predicated region
        $region17: #{encoder_client_emb_forward.1} parent=11 // pred_check
          %p302 = pneg %p90
        $region18: #{encoder_client_emb_forward.1} parent=11 // pred_check_branch
          %304 = sbr.rel (%p302) target = $region20
        $region19: #{encoder_client_emb_forward.1} parent=11 // pred_region
          _
        $region20: #{encoder_client_emb_forward.1} parent=11 // pred_fallthru
          _
        // Predicated region
        $region21: #{encoder_client_emb_forward.1} parent=11 // pred_check
          %p305 = pneg %p111
        $region22: #{encoder_client_emb_forward.1} parent=11 // pred_check_branch
          %307 = sbr.rel (%p305) target = $region24
        $region23: #{encoder_client_emb_forward.1} parent=11 // pred_region
          %309 = vsyncadd [#allocation3], 0
          %s310 = sshll.u32 %s3, 4
          %s311 = int_to_ptr.hbm [resolvable:$true] %s310
          %s312 = sshll.u32 [#allocation2], 4
          %s313 = int_to_ptr.vmem [resolvable:$true] %s312
          %318 = dma.hbm_to_vmem [thread:$0]  %s311, 2048, %s313, [#allocation3], 128, 128, 8
        $region24: #{encoder_client_emb_forward.1} parent=11 // pred_fallthru
          _
        // Predicated region
        $region25: #{encoder_client_emb_forward.1} parent=11 // pred_check
          %p319 = pneg %p132
        $region26: #{encoder_client_emb_forward.1} parent=11 // pred_check_branch
          %321 = sbr.rel (%p319) target = $region28
        $region27: #{encoder_client_emb_forward.1} parent=11 // pred_region
          _
        $region28: #{encoder_client_emb_forward.1} parent=11 // pred_fallthru
          _
        // Predicated region
        $region29: #{encoder_client_emb_forward.1} parent=11 // pred_check
          %p322 = pneg %p153
        $region30: #{encoder_client_emb_forward.1} parent=11 // pred_check_branch
          %324 = sbr.rel (%p322) target = $region32
        $region31: #{encoder_client_emb_forward.1} parent=11 // pred_region
          %326 = vsyncadd [#allocation6], 0
          %s327 = sshll.u32 %s5, 4
          %s328 = int_to_ptr.hbm [resolvable:$true] %s327
          %s329 = sshll.u32 [#allocation5], 4
          %s330 = int_to_ptr.vmem [resolvable:$true] %s329
          %335 = dma.hbm_to_vmem [thread:$0]  %s328, 4096, %s330, [#allocation6], 128, 128, 8
        $region32: #{encoder_client_emb_forward.1} parent=11 // pred_fallthru
          _
        // Predicated region
        $region33: #{encoder_client_emb_forward.1} parent=11 // pred_check
          %p336 = pneg %p174
        $region34: #{encoder_client_emb_forward.1} parent=11 // pred_check_branch
          %338 = sbr.rel (%p336) target = $region36
        $region35: #{encoder_client_emb_forward.1} parent=11 // pred_region
          _
        $region36: #{encoder_client_emb_forward.1} parent=11 // pred_fallthru
          _
        // Predicated region
        $region37: #{encoder_client_emb_forward.1} parent=11 // pred_check
          %p339 = pneg %p195
        $region38: #{encoder_client_emb_forward.1} parent=11 // pred_check_branch
          %341 = sbr.rel (%p339) target = $region40
        $region39: #{encoder_client_emb_forward.1} parent=11 // pred_region
          %343 = vsyncadd [#allocation6], 0
          %s344 = sshll.u32 %s7, 4
          %s345 = int_to_ptr.hbm [resolvable:$true] %s344
          %s346 = sshll.u32 [#allocation7], 4
          %s347 = int_to_ptr.vmem [resolvable:$true] %s346
          %352 = dma.hbm_to_vmem [thread:$0]  %s345, 2048, %s347, [#allocation6], 64, 64, 4
        $region40: #{encoder_client_emb_forward.1} parent=11 // pred_fallthru
          _
        // Predicated region
        $region41: #{encoder_client_emb_forward.1} parent=11 // pred_check
          %p353 = pneg %p216
        $region42: #{encoder_client_emb_forward.1} parent=11 // pred_check_branch
          %355 = sbr.rel (%p353) target = $region44
        $region43: #{encoder_client_emb_forward.1} parent=11 // pred_region
          _
        $region44: #{encoder_client_emb_forward.1} parent=11 // pred_fallthru
          _
        // Predicated region
        $region45: #{encoder_client_emb_forward.1} parent=11 // pred_check
          %p356 = pneg %p237
        $region46: #{encoder_client_emb_forward.1} parent=11 // pred_check_branch
          %358 = sbr.rel (%p356) target = $region48
        $region47: #{encoder_client_emb_forward.1} parent=11 // pred_region
          _
        $region48: #{encoder_client_emb_forward.1} parent=11 // pred_fallthru
          _
        // Predicated region
        $region49: #{encoder_client_emb_forward.1} parent=11 // pred_check
          %p359 = pneg %p258
        $region50: #{encoder_client_emb_forward.1} parent=11 // pred_check_branch
          %361 = sbr.rel (%p359) target = $region52
        $region51: #{encoder_client_emb_forward.1} parent=11 // pred_region
          _
        $region52: #{encoder_client_emb_forward.1} parent=11 // pred_fallthru
          _
      $region12: #{encoder_client_emb_forward.1} parent=5 // pred_fallthru
        _
      %p362 = scmp.lt.s32.totalorder %s22, 2
      // Predicated region
      $region53: #{encoder_client_emb_forward.1} parent=5 // pred_check
        %p363 = pneg %p362
      $region54: #{encoder_client_emb_forward.1} parent=5 // pred_check_branch
        %365 = sbr.rel (%p363) target = $region56
      $region55: #{encoder_client_emb_forward.1} parent=5 // pred_region
        // Predicated region
        $region57: #{encoder_client_emb_forward.1} parent=55 // pred_check
          %p366 = pneg %p42
        $region58: #{encoder_client_emb_forward.1} parent=55 // pred_check_branch
          %368 = sbr.rel (%p366) target = $region60
        $region59: #{encoder_client_emb_forward.1} parent=55 // pred_region
          %p369 = scmp.lt.s32.totalorder %s22, 1
          %s370 = scalar_select %p369, %s22, 1
          %s371 = smul.addr %s370, 4
          %s372 = scalar_lea.vmem %s0, %s371
        $region60: #{encoder_client_emb_forward.1} parent=55 // pred_fallthru
          _
      $region56: #{encoder_client_emb_forward.1} parent=5 // pred_fallthru
        _
      %p373 = scmp.le.s32.totalorder 1, %s22
      %p374 = scmp.lt.s32.totalorder %s22, 3
      %p375 = pnand %p373, %p374
      %p376 = pneg %p375
      // Predicated region
      $region61: #{encoder_client_emb_forward.1} parent=5 // pred_check
        _
      $region62: #{encoder_client_emb_forward.1} parent=5 // pred_check_branch
        %378 = sbr.rel (%p375) target = $region64
      $region63: #{encoder_client_emb_forward.1} parent=5 // pred_region
        %s379 = ssub.s32 %s22, 1
        // Predicated region
        $region65: #{encoder_client_emb_forward.1} parent=63 // pred_check
          %p380 = pneg %p111
        $region66: #{encoder_client_emb_forward.1} parent=63 // pred_check_branch
          %382 = sbr.rel (%p380) target = $region68
        $region67: #{encoder_client_emb_forward.1} parent=63 // pred_region
          %384 = dma.done [#allocation3], 2048
        $region68: #{encoder_client_emb_forward.1} parent=63 // pred_fallthru
          _
        // Predicated region
        $region69: #{encoder_client_emb_forward.1} parent=63 // pred_check
          %p385 = pneg %p153
        $region70: #{encoder_client_emb_forward.1} parent=63 // pred_check_branch
          %387 = sbr.rel (%p385) target = $region72
        $region71: #{encoder_client_emb_forward.1} parent=63 // pred_region
          %389 = dma.done [#allocation6], 4096
        $region72: #{encoder_client_emb_forward.1} parent=63 // pred_fallthru
          _
        // Predicated region
        $region73: #{encoder_client_emb_forward.1} parent=63 // pred_check
          %p390 = pneg %p195
        $region74: #{encoder_client_emb_forward.1} parent=63 // pred_check_branch
          %392 = sbr.rel (%p390) target = $region76
        $region75: #{encoder_client_emb_forward.1} parent=63 // pred_region
          %394 = dma.done [#allocation6], 2048
        $region76: #{encoder_client_emb_forward.1} parent=63 // pred_fallthru
          _
        %p395 = scmp.lt.s32.totalorder %s27, 1
        %s396 = scalar_select %p395, %s27, 1
        %s397 = smul.addr %s396, 4
        %s398 = scalar_lea.vmem %s0, %s397
        %p399 = pneg %p48
        %p400 = pneg %p45
        %p401 = pneg %p69
        %p402 = pneg %p66
        %p403 = pneg %p90
        %p404 = pneg %p87
        %p405 = pneg %p111
        %p406 = pneg %p108
        %p407 = pneg %p132
        %p408 = pneg %p129
        %p409 = pneg %p153
        %p410 = pneg %p150
        %p411 = pneg %p174
        %p412 = pneg %p171
        %p413 = pneg %p195
        %p414 = pneg %p192
        %p415 = pneg %p216
        %p416 = pneg %p213
        %p417 = pneg %p237
        %p418 = pneg %p234
        %p419 = pneg %p258
        %p420 = pneg %p255
        %p421 = pneg %p284
        %p422 = pneg %p281
        %s423 = sand.u32 %s271, 1
        %s424 = scalar_lea.sflag [#allocation4], %s423
        %s425 = sand.u32 %s271, 1
        %s426 = smul.addr %s425, 8
        %s427 = scalar_lea.vmem [#allocation8], %s426
        %p428 = scmp.lt.s32.totalorder %s27, 1
        %s429 = scalar_select %p428, %s27, 1
        %s430 = smul.addr %s429, 4
        %s431 = scalar_lea.vmem %s0, %s430
        %v433 = vld [vmem:[%s431] sm:$0xf]
        %v434 = vld [vmem:[%s1] sm:$0xf]
        %v435 = vld [vmem:[%s1 + $0x4] sm:$0xf]
        %v436 = vld [vmem:[%s1 + $0x8] sm:$0xf]
        %v437 = vld [vmem:[%s1 + $0xc] sm:$0xf]
        %v438 = vld [vmem:[%s2] sm:$0x1]
        %v440 = vperm.slane %v438, 0
        %v446 = vunpack.c.l.b16 %v434
        %v447 = vunpack.c.l.b16 %v435
        %v448 = vunpack.c.l.b16 %v436
        %v449 = vunpack.c.l.b16 %v437
        %v450 = vpack.c.b16 %v447, %v446
        %v451 = vpack.c.b16 %v449, %v448
        %vm454 = vcmask 261120
        %v456 = vsel %vm454, %v433, 0
        %458 = vmatpush.bf16.msra.mxu0 0
        %459 = vmatpush.bf16.msra.mxu0 0
        %460 = vmatpush.bf16.msra.mxu0 0
        %461 = vmatpush.bf16.msra.mxu0 0
        %462 = vmatpush.bf16.msra.mxu0 0
        %463 = vmatpush.bf16.msra.mxu0 0
        %464 = vmatpush.bf16.msra.mxu0 %v451
        %465 = vmatpush.bf16.msra.mxu0 %v450
        %466 = vmatmul.bf16.gmra.mxu0 %v456
        %v467 = vpop.f32.mrf.mxu0
        %v468 = vadd.f32 %v440, %v467
        %v469 = vpop.f32.mrf.mxu0
        %470 = vdwg.mxu0
        %v471 = vmul.f32 %v468, 0.02
        %v472 = vmax.f32 %v468, %v471
        %v473 = vpack.c.bf16 %v472, %v472
        %v474 = vld [vmem:[#allocation2] sm:$0xff]
        %v475 = vld [vmem:[#allocation2 + $0x8] sm:$0xff]
        %v476 = vld [vmem:[#allocation2 + $0x10] sm:$0xff]
        %v477 = vld [vmem:[#allocation2 + $0x18] sm:$0xff]
        %v478 = vld [vmem:[#allocation2 + $0x20] sm:$0xff]
        %v479 = vld [vmem:[#allocation2 + $0x28] sm:$0xff]
        %v480 = vld [vmem:[#allocation2 + $0x30] sm:$0xff]
        %v481 = vld [vmem:[#allocation2 + $0x38] sm:$0xff]
        %v482 = vld [vmem:[#allocation2 + $0x40] sm:$0xff]
        %v483 = vld [vmem:[#allocation2 + $0x48] sm:$0xff]
        %v484 = vld [vmem:[#allocation2 + $0x50] sm:$0xff]
        %v485 = vld [vmem:[#allocation2 + $0x58] sm:$0xff]
        %v486 = vld [vmem:[#allocation2 + $0x60] sm:$0xff]
        %v487 = vld [vmem:[#allocation2 + $0x68] sm:$0xff]
        %v488 = vld [vmem:[#allocation2 + $0x70] sm:$0xff]
        %v489 = vld [vmem:[#allocation2 + $0x78] sm:$0xff]
        %v490 = vld [vmem:[%s4] sm:$0x3]
        %v492 = vperm.slane %v490, 0
        %v493 = vperm.slane %v490, 1
        %v512 = vunpack.c.l.b16 %v474
        %v513 = vunpack.c.h.b16 %v474
        %v514 = vunpack.c.l.b16 %v475
        %v515 = vunpack.c.h.b16 %v475
        %v516 = vunpack.c.l.b16 %v476
        %v517 = vunpack.c.h.b16 %v476
        %v518 = vunpack.c.l.b16 %v477
        %v519 = vunpack.c.h.b16 %v477
        %v520 = vunpack.c.l.b16 %v478
        %v521 = vunpack.c.h.b16 %v478
        %v522 = vunpack.c.l.b16 %v479
        %v523 = vunpack.c.h.b16 %v479
        %v524 = vunpack.c.l.b16 %v480
        %v525 = vunpack.c.h.b16 %v480
        %v526 = vunpack.c.l.b16 %v481
        %v527 = vunpack.c.h.b16 %v481
        %v528 = vunpack.c.l.b16 %v482
        %v529 = vunpack.c.h.b16 %v482
        %v530 = vunpack.c.l.b16 %v483
        %v531 = vunpack.c.h.b16 %v483
        %v532 = vunpack.c.l.b16 %v484
        %v533 = vunpack.c.h.b16 %v484
        %v534 = vunpack.c.l.b16 %v485
        %v535 = vunpack.c.h.b16 %v485
        %v536 = vunpack.c.l.b16 %v486
        %v537 = vunpack.c.h.b16 %v486
        %v538 = vunpack.c.l.b16 %v487
        %v539 = vunpack.c.h.b16 %v487
        %v540 = vunpack.c.l.b16 %v488
        %v541 = vunpack.c.h.b16 %v488
        %v542 = vunpack.c.l.b16 %v489
        %v543 = vunpack.c.h.b16 %v489
        %v544 = vpack.c.b16 %v514, %v512
        %v545 = vpack.c.b16 %v515, %v513
        %v546 = vpack.c.b16 %v518, %v516
        %v547 = vpack.c.b16 %v519, %v517
        %v548 = vpack.c.b16 %v522, %v520
        %v549 = vpack.c.b16 %v523, %v521
        %v550 = vpack.c.b16 %v526, %v524
        %v551 = vpack.c.b16 %v527, %v525
        %v552 = vpack.c.b16 %v530, %v528
        %v553 = vpack.c.b16 %v531, %v529
        %v554 = vpack.c.b16 %v534, %v532
        %v555 = vpack.c.b16 %v535, %v533
        %v556 = vpack.c.b16 %v538, %v536
        %v557 = vpack.c.b16 %v539, %v537
        %v558 = vpack.c.b16 %v542, %v540
        %v559 = vpack.c.b16 %v543, %v541
        %576 = vmatpush.bf16.msra.mxu0 %v558
        %577 = vmatpush.bf16.msra.mxu0 %v556
        %578 = vmatpush.bf16.msra.mxu0 %v554
        %579 = vmatpush.bf16.msra.mxu0 %v552
        %580 = vmatpush.bf16.msra.mxu0 %v550
        %581 = vmatpush.bf16.msra.mxu0 %v548
        %582 = vmatpush.bf16.msra.mxu0 %v546
        %583 = vmatpush.bf16.msra.mxu0 %v544
        %584 = vmatmul.bf16.gmra.mxu0 %v473
        %v585 = vpop.f32.mrf.mxu0
        %v586 = vadd.f32 %v492, %v585
        %v587 = vpop.f32.mrf.mxu0
        %588 = vdwg.mxu0
        %589 = vmatpush.bf16.msra.mxu0 %v559
        %590 = vmatpush.bf16.msra.mxu0 %v557
        %591 = vmatpush.bf16.msra.mxu0 %v555
        %592 = vmatpush.bf16.msra.mxu0 %v553
        %593 = vmatpush.bf16.msra.mxu0 %v551
        %594 = vmatpush.bf16.msra.mxu0 %v549
        %595 = vmatpush.bf16.msra.mxu0 %v547
        %596 = vmatpush.bf16.msra.mxu0 %v545
        %597 = vmatmul.bf16.gmra.mxu0 %v473
        %v598 = vpop.f32.mrf.mxu0
        %v599 = vadd.f32 %v493, %v598
        %v600 = vpop.f32.mrf.mxu0
        %601 = vdwg.mxu0
        %v602 = vmul.f32 %v586, 0.02
        %v603 = vmul.f32 %v599, 0.02
        %v604 = vmax.f32 %v586, %v602
        %v605 = vmax.f32 %v599, %v603
        %v606 = vpack.c.bf16 %v604, %v604
        %v607 = vpack.c.bf16 %v605, %v605
        %v608 = vld [vmem:[#allocation5] sm:$0xff]
        %v609 = vld [vmem:[#allocation5 + $0x8] sm:$0xff]
        %v610 = vld [vmem:[#allocation5 + $0x10] sm:$0xff]
        %v611 = vld [vmem:[#allocation5 + $0x18] sm:$0xff]
        %v612 = vld [vmem:[#allocation5 + $0x20] sm:$0xff]
        %v613 = vld [vmem:[#allocation5 + $0x28] sm:$0xff]
        %v614 = vld [vmem:[#allocation5 + $0x30] sm:$0xff]
        %v615 = vld [vmem:[#allocation5 + $0x38] sm:$0xff]
        %v616 = vld [vmem:[#allocation5 + $0x40] sm:$0xff]
        %v617 = vld [vmem:[#allocation5 + $0x48] sm:$0xff]
        %v618 = vld [vmem:[#allocation5 + $0x50] sm:$0xff]
        %v619 = vld [vmem:[#allocation5 + $0x58] sm:$0xff]
        %v620 = vld [vmem:[#allocation5 + $0x60] sm:$0xff]
        %v621 = vld [vmem:[#allocation5 + $0x68] sm:$0xff]
        %v622 = vld [vmem:[#allocation5 + $0x70] sm:$0xff]
        %v623 = vld [vmem:[#allocation5 + $0x78] sm:$0xff]
        %v624 = vld [vmem:[#allocation5 + $0x80] sm:$0xff]
        %v625 = vld [vmem:[#allocation5 + $0x88] sm:$0xff]
        %v626 = vld [vmem:[#allocation5 + $0x90] sm:$0xff]
        %v627 = vld [vmem:[#allocation5 + $0x98] sm:$0xff]
        %v628 = vld [vmem:[#allocation5 + $0xa0] sm:$0xff]
        %v629 = vld [vmem:[#allocation5 + $0xa8] sm:$0xff]
        %v630 = vld [vmem:[#allocation5 + $0xb0] sm:$0xff]
        %v631 = vld [vmem:[#allocation5 + $0xb8] sm:$0xff]
        %v632 = vld [vmem:[#allocation5 + $0xc0] sm:$0xff]
        %v633 = vld [vmem:[#allocation5 + $0xc8] sm:$0xff]
        %v634 = vld [vmem:[#allocation5 + $0xd0] sm:$0xff]
        %v635 = vld [vmem:[#allocation5 + $0xd8] sm:$0xff]
        %v636 = vld [vmem:[#allocation5 + $0xe0] sm:$0xff]
        %v637 = vld [vmem:[#allocation5 + $0xe8] sm:$0xff]
        %v638 = vld [vmem:[#allocation5 + $0xf0] sm:$0xff]
        %v639 = vld [vmem:[#allocation5 + $0xf8] sm:$0xff]
        %v640 = vld [vmem:[%s6] sm:$0x3]
        %v642 = vperm.slane %v640, 0
        %v643 = vperm.slane %v640, 1
        %v678 = vunpack.c.l.b16 %v608
        %v679 = vunpack.c.h.b16 %v608
        %v680 = vunpack.c.l.b16 %v609
        %v681 = vunpack.c.h.b16 %v609
        %v682 = vunpack.c.l.b16 %v610
        %v683 = vunpack.c.h.b16 %v610
        %v684 = vunpack.c.l.b16 %v611
        %v685 = vunpack.c.h.b16 %v611
        %v686 = vunpack.c.l.b16 %v612
        %v687 = vunpack.c.h.b16 %v612
        %v688 = vunpack.c.l.b16 %v613
        %v689 = vunpack.c.h.b16 %v613
        %v690 = vunpack.c.l.b16 %v614
        %v691 = vunpack.c.h.b16 %v614
        %v692 = vunpack.c.l.b16 %v615
        %v693 = vunpack.c.h.b16 %v615
        %v694 = vunpack.c.l.b16 %v616
        %v695 = vunpack.c.h.b16 %v616
        %v696 = vunpack.c.l.b16 %v617
        %v697 = vunpack.c.h.b16 %v617
        %v698 = vunpack.c.l.b16 %v618
        %v699 = vunpack.c.h.b16 %v618
        %v700 = vunpack.c.l.b16 %v619
        %v701 = vunpack.c.h.b16 %v619
        %v702 = vunpack.c.l.b16 %v620
        %v703 = vunpack.c.h.b16 %v620
        %v704 = vunpack.c.l.b16 %v621
        %v705 = vunpack.c.h.b16 %v621
        %v706 = vunpack.c.l.b16 %v622
        %v707 = vunpack.c.h.b16 %v622
        %v708 = vunpack.c.l.b16 %v623
        %v709 = vunpack.c.h.b16 %v623
        %v710 = vunpack.c.l.b16 %v624
        %v711 = vunpack.c.h.b16 %v624
        %v712 = vunpack.c.l.b16 %v625
        %v713 = vunpack.c.h.b16 %v625
        %v714 = vunpack.c.l.b16 %v626
        %v715 = vunpack.c.h.b16 %v626
        %v716 = vunpack.c.l.b16 %v627
        %v717 = vunpack.c.h.b16 %v627
        %v718 = vunpack.c.l.b16 %v628
        %v719 = vunpack.c.h.b16 %v628
        %v720 = vunpack.c.l.b16 %v629
        %v721 = vunpack.c.h.b16 %v629
        %v722 = vunpack.c.l.b16 %v630
        %v723 = vunpack.c.h.b16 %v630
        %v724 = vunpack.c.l.b16 %v631
        %v725 = vunpack.c.h.b16 %v631
        %v726 = vunpack.c.l.b16 %v632
        %v727 = vunpack.c.h.b16 %v632
        %v728 = vunpack.c.l.b16 %v633
        %v729 = vunpack.c.h.b16 %v633
        %v730 = vunpack.c.l.b16 %v634
        %v731 = vunpack.c.h.b16 %v634
        %v732 = vunpack.c.l.b16 %v635
        %v733 = vunpack.c.h.b16 %v635
        %v734 = vunpack.c.l.b16 %v636
        %v735 = vunpack.c.h.b16 %v636
        %v736 = vunpack.c.l.b16 %v637
        %v737 = vunpack.c.h.b16 %v637
        %v738 = vunpack.c.l.b16 %v638
        %v739 = vunpack.c.h.b16 %v638
        %v740 = vunpack.c.l.b16 %v639
        %v741 = vunpack.c.h.b16 %v639
        %v742 = vpack.c.b16 %v680, %v678
        %v743 = vpack.c.b16 %v681, %v679
        %v744 = vpack.c.b16 %v684, %v682
        %v745 = vpack.c.b16 %v685, %v683
        %v746 = vpack.c.b16 %v688, %v686
        %v747 = vpack.c.b16 %v689, %v687
        %v748 = vpack.c.b16 %v692, %v690
        %v749 = vpack.c.b16 %v693, %v691
        %v750 = vpack.c.b16 %v696, %v694
        %v751 = vpack.c.b16 %v697, %v695
        %v752 = vpack.c.b16 %v700, %v698
        %v753 = vpack.c.b16 %v701, %v699
        %v754 = vpack.c.b16 %v704, %v702
        %v755 = vpack.c.b16 %v705, %v703
        %v756 = vpack.c.b16 %v708, %v706
        %v757 = vpack.c.b16 %v709, %v707
        %v758 = vpack.c.b16 %v712, %v710
        %v759 = vpack.c.b16 %v713, %v711
        %v760 = vpack.c.b16 %v716, %v714
        %v761 = vpack.c.b16 %v717, %v715
        %v762 = vpack.c.b16 %v720, %v718
        %v763 = vpack.c.b16 %v721, %v719
        %v764 = vpack.c.b16 %v724, %v722
        %v765 = vpack.c.b16 %v725, %v723
        %v766 = vpack.c.b16 %v728, %v726
        %v767 = vpack.c.b16 %v729, %v727
        %v768 = vpack.c.b16 %v732, %v730
        %v769 = vpack.c.b16 %v733, %v731
        %v770 = vpack.c.b16 %v736, %v734
        %v771 = vpack.c.b16 %v737, %v735
        %v772 = vpack.c.b16 %v740, %v738
        %v773 = vpack.c.b16 %v741, %v739
        %806 = vmatpush.bf16.msra.mxu0 %v756
        %807 = vmatpush.bf16.msra.mxu0 %v754
        %808 = vmatpush.bf16.msra.mxu0 %v752
        %809 = vmatpush.bf16.msra.mxu0 %v750
        %810 = vmatpush.bf16.msra.mxu0 %v748
        %811 = vmatpush.bf16.msra.mxu0 %v746
        %812 = vmatpush.bf16.msra.mxu0 %v744
        %813 = vmatpush.bf16.msra.mxu0 %v742
        %814 = vmatmul.bf16.gmra.mxu0 %v606
        %v815 = vpop.f32.mrf.mxu0
        %v816 = vadd.f32 %v642, %v815
        %v817 = vpop.f32.mrf.mxu0
        %818 = vdwg.mxu0
        %819 = vmatpush.bf16.msra.mxu0 %v772
        %820 = vmatpush.bf16.msra.mxu0 %v770
        %821 = vmatpush.bf16.msra.mxu0 %v768
        %822 = vmatpush.bf16.msra.mxu0 %v766
        %823 = vmatpush.bf16.msra.mxu0 %v764
        %824 = vmatpush.bf16.msra.mxu0 %v762
        %825 = vmatpush.bf16.msra.mxu0 %v760
        %826 = vmatpush.bf16.msra.mxu0 %v758
        %827 = vmatmul.bf16.gmra.mxu0 %v607
        %v828 = vpop.f32.mrf.mxu0
        %v829 = vadd.f32 %v816, %v828
        %v830 = vpop.f32.mrf.mxu0
        %831 = vdwg.mxu0
        %832 = vmatpush.bf16.msra.mxu0 %v757
        %833 = vmatpush.bf16.msra.mxu0 %v755
        %834 = vmatpush.bf16.msra.mxu0 %v753
        %835 = vmatpush.bf16.msra.mxu0 %v751
        %836 = vmatpush.bf16.msra.mxu0 %v749
        %837 = vmatpush.bf16.msra.mxu0 %v747
        %838 = vmatpush.bf16.msra.mxu0 %v745
        %839 = vmatpush.bf16.msra.mxu0 %v743
        %840 = vmatmul.bf16.gmra.mxu0 %v606
        %v841 = vpop.f32.mrf.mxu0
        %v842 = vadd.f32 %v643, %v841
        %v843 = vpop.f32.mrf.mxu0
        %844 = vdwg.mxu0
        %845 = vmatpush.bf16.msra.mxu0 %v773
        %846 = vmatpush.bf16.msra.mxu0 %v771
        %847 = vmatpush.bf16.msra.mxu0 %v769
        %848 = vmatpush.bf16.msra.mxu0 %v767
        %849 = vmatpush.bf16.msra.mxu0 %v765
        %850 = vmatpush.bf16.msra.mxu0 %v763
        %851 = vmatpush.bf16.msra.mxu0 %v761
        %852 = vmatpush.bf16.msra.mxu0 %v759
        %853 = vmatmul.bf16.gmra.mxu0 %v607
        %v854 = vpop.f32.mrf.mxu0
        %v855 = vadd.f32 %v842, %v854
        %v856 = vpop.f32.mrf.mxu0
        %857 = vdwg.mxu0
        %v858 = vmul.f32 %v829, 0.02
        %v859 = vmul.f32 %v855, 0.02
        %v860 = vmax.f32 %v829, %v858
        %v861 = vmax.f32 %v855, %v859
        %v862 = vpack.c.bf16 %v860, %v860
        %v863 = vpack.c.bf16 %v861, %v861
        %v864 = vld [vmem:[#allocation7] sm:$0xf]
        %v865 = vld [vmem:[#allocation7 + $0x4] sm:$0xf]
        %v866 = vld [vmem:[#allocation7 + $0x8] sm:$0xf]
        %v867 = vld [vmem:[#allocation7 + $0xc] sm:$0xf]
        %v868 = vld [vmem:[#allocation7 + $0x10] sm:$0xf]
        %v869 = vld [vmem:[#allocation7 + $0x14] sm:$0xf]
        %v870 = vld [vmem:[#allocation7 + $0x18] sm:$0xf]
        %v871 = vld [vmem:[#allocation7 + $0x1c] sm:$0xf]
        %v872 = vld [vmem:[#allocation7 + $0x20] sm:$0xf]
        %v873 = vld [vmem:[#allocation7 + $0x24] sm:$0xf]
        %v874 = vld [vmem:[#allocation7 + $0x28] sm:$0xf]
        %v875 = vld [vmem:[#allocation7 + $0x2c] sm:$0xf]
        %v876 = vld [vmem:[#allocation7 + $0x30] sm:$0xf]
        %v877 = vld [vmem:[#allocation7 + $0x34] sm:$0xf]
        %v878 = vld [vmem:[#allocation7 + $0x38] sm:$0xf]
        %v879 = vld [vmem:[#allocation7 + $0x3c] sm:$0xf]
        %v880 = vld [vmem:[#allocation7 + $0x40] sm:$0xf]
        %v881 = vld [vmem:[#allocation7 + $0x44] sm:$0xf]
        %v882 = vld [vmem:[#allocation7 + $0x48] sm:$0xf]
        %v883 = vld [vmem:[#allocation7 + $0x4c] sm:$0xf]
        %v884 = vld [vmem:[#allocation7 + $0x50] sm:$0xf]
        %v885 = vld [vmem:[#allocation7 + $0x54] sm:$0xf]
        %v886 = vld [vmem:[#allocation7 + $0x58] sm:$0xf]
        %v887 = vld [vmem:[#allocation7 + $0x5c] sm:$0xf]
        %v888 = vld [vmem:[#allocation7 + $0x60] sm:$0xf]
        %v889 = vld [vmem:[#allocation7 + $0x64] sm:$0xf]
        %v890 = vld [vmem:[#allocation7 + $0x68] sm:$0xf]
        %v891 = vld [vmem:[#allocation7 + $0x6c] sm:$0xf]
        %v892 = vld [vmem:[#allocation7 + $0x70] sm:$0xf]
        %v893 = vld [vmem:[#allocation7 + $0x74] sm:$0xf]
        %v894 = vld [vmem:[#allocation7 + $0x78] sm:$0xf]
        %v895 = vld [vmem:[#allocation7 + $0x7c] sm:$0xf]
        %v896 = vld [vmem:[%s8] sm:$0x1]
        %v898 = vperm.slane %v896, 0
        %v932 = vunpack.c.l.b16 %v864
        %v933 = vunpack.c.l.b16 %v865
        %v934 = vunpack.c.l.b16 %v866
        %v935 = vunpack.c.l.b16 %v867
        %v936 = vunpack.c.l.b16 %v868
        %v937 = vunpack.c.l.b16 %v869
        %v938 = vunpack.c.l.b16 %v870
        %v939 = vunpack.c.l.b16 %v871
        %v940 = vunpack.c.l.b16 %v872
        %v941 = vunpack.c.l.b16 %v873
        %v942 = vunpack.c.l.b16 %v874
        %v943 = vunpack.c.l.b16 %v875
        %v944 = vunpack.c.l.b16 %v876
        %v945 = vunpack.c.l.b16 %v877
        %v946 = vunpack.c.l.b16 %v878
        %v947 = vunpack.c.l.b16 %v879
        %v948 = vunpack.c.l.b16 %v880
        %v949 = vunpack.c.l.b16 %v881
        %v950 = vunpack.c.l.b16 %v882
        %v951 = vunpack.c.l.b16 %v883
        %v952 = vunpack.c.l.b16 %v884
        %v953 = vunpack.c.l.b16 %v885
        %v954 = vunpack.c.l.b16 %v886
        %v955 = vunpack.c.l.b16 %v887
        %v956 = vunpack.c.l.b16 %v888
        %v957 = vunpack.c.l.b16 %v889
        %v958 = vunpack.c.l.b16 %v890
        %v959 = vunpack.c.l.b16 %v891
        %v960 = vunpack.c.l.b16 %v892
        %v961 = vunpack.c.l.b16 %v893
        %v962 = vunpack.c.l.b16 %v894
        %v963 = vunpack.c.l.b16 %v895
        %v964 = vpack.c.b16 %v933, %v932
        %v965 = vpack.c.b16 %v935, %v934
        %v966 = vpack.c.b16 %v937, %v936
        %v967 = vpack.c.b16 %v939, %v938
        %v968 = vpack.c.b16 %v941, %v940
        %v969 = vpack.c.b16 %v943, %v942
        %v970 = vpack.c.b16 %v945, %v944
        %v971 = vpack.c.b16 %v947, %v946
        %v972 = vpack.c.b16 %v949, %v948
        %v973 = vpack.c.b16 %v951, %v950
        %v974 = vpack.c.b16 %v953, %v952
        %v975 = vpack.c.b16 %v955, %v954
        %v976 = vpack.c.b16 %v957, %v956
        %v977 = vpack.c.b16 %v959, %v958
        %v978 = vpack.c.b16 %v961, %v960
        %v979 = vpack.c.b16 %v963, %v962
        %996 = vmatpush.bf16.msra.mxu0 %v971
        %997 = vmatpush.bf16.msra.mxu0 %v970
        %998 = vmatpush.bf16.msra.mxu0 %v969
        %999 = vmatpush.bf16.msra.mxu0 %v968
        %1000 = vmatpush.bf16.msra.mxu0 %v967
        %1001 = vmatpush.bf16.msra.mxu0 %v966
        %1002 = vmatpush.bf16.msra.mxu0 %v965
        %1003 = vmatpush.bf16.msra.mxu0 %v964
        %1004 = vmatmul.bf16.gmra.mxu0 %v862
        %v1005 = vpop.f32.mrf.mxu0
        %v1006 = vadd.f32 %v898, %v1005
        %v1007 = vpop.f32.mrf.mxu0
        %1008 = vdwg.mxu0
        %1009 = vmatpush.bf16.msra.mxu0 %v979
        %1010 = vmatpush.bf16.msra.mxu0 %v978
        %1011 = vmatpush.bf16.msra.mxu0 %v977
        %1012 = vmatpush.bf16.msra.mxu0 %v976
        %1013 = vmatpush.bf16.msra.mxu0 %v975
        %1014 = vmatpush.bf16.msra.mxu0 %v974
        %1015 = vmatpush.bf16.msra.mxu0 %v973
        %1016 = vmatpush.bf16.msra.mxu0 %v972
        %1017 = vmatmul.bf16.gmra.mxu0 %v863
        %v1018 = vpop.f32.mrf.mxu0
        %v1019 = vadd.f32 %v1006, %v1018
        %v1020 = vpop.f32.mrf.mxu0
        %1021 = vdwg.mxu0
        %v1022 = vmul.f32 %v1019, 0.02
        %v1023 = vmax.f32 %v1019, %v1022
        %v1024 = vpack.c.bf16 %v1023, %v1023
        %v1025 = vld [vmem:[%s9] sm:$0xf]
        %v1026 = vld [vmem:[%s9 + $0x4] sm:$0xf]
        %v1027 = vld [vmem:[%s9 + $0x8] sm:$0xf]
        %v1028 = vld [vmem:[%s9 + $0xc] sm:$0xf]
        %v1029 = vld [vmem:[%s9 + $0x10] sm:$0xf]
        %v1030 = vld [vmem:[%s9 + $0x14] sm:$0xf]
        %v1031 = vld [vmem:[%s9 + $0x18] sm:$0xf]
        %v1032 = vld [vmem:[%s9 + $0x1c] sm:$0xf]
        %v1033 = vld [vmem:[%s9 + $0x20] sm:$0xf]
        %v1034 = vld [vmem:[%s9 + $0x24] sm:$0xf]
        %v1035 = vld [vmem:[%s9 + $0x28] sm:$0xf]
        %v1036 = vld [vmem:[%s9 + $0x2c] sm:$0xf]
        %v1037 = vld [vmem:[%s9 + $0x30] sm:$0xf]
        %v1038 = vld [vmem:[%s9 + $0x34] sm:$0xf]
        %v1039 = vld [vmem:[%s9 + $0x38] sm:$0xf]
        %v1040 = vld [vmem:[%s9 + $0x3c] sm:$0xf]
        %v1041 = vld [vmem:[%s10] sm:$0x1]
        %v1043 = vperm.slane %v1041, 0
        %v1061 = vunpack.c.l.b16 %v1025
        %v1062 = vunpack.c.l.b16 %v1026
        %v1063 = vunpack.c.l.b16 %v1027
        %v1064 = vunpack.c.l.b16 %v1028
        %v1065 = vunpack.c.l.b16 %v1029
        %v1066 = vunpack.c.l.b16 %v1030
        %v1067 = vunpack.c.l.b16 %v1031
        %v1068 = vunpack.c.l.b16 %v1032
        %v1069 = vunpack.c.l.b16 %v1033
        %v1070 = vunpack.c.l.b16 %v1034
        %v1071 = vunpack.c.l.b16 %v1035
        %v1072 = vunpack.c.l.b16 %v1036
        %v1073 = vunpack.c.l.b16 %v1037
        %v1074 = vunpack.c.l.b16 %v1038
        %v1075 = vunpack.c.l.b16 %v1039
        %v1076 = vunpack.c.l.b16 %v1040
        %v1077 = vpack.c.b16 %v1062, %v1061
        %v1078 = vpack.c.b16 %v1064, %v1063
        %v1079 = vpack.c.b16 %v1066, %v1065
        %v1080 = vpack.c.b16 %v1068, %v1067
        %v1081 = vpack.c.b16 %v1070, %v1069
        %v1082 = vpack.c.b16 %v1072, %v1071
        %v1083 = vpack.c.b16 %v1074, %v1073
        %v1084 = vpack.c.b16 %v1076, %v1075
        %1093 = vmatpush.bf16.msra.mxu0 %v1084
        %1094 = vmatpush.bf16.msra.mxu0 %v1083
        %1095 = vmatpush.bf16.msra.mxu0 %v1082
        %1096 = vmatpush.bf16.msra.mxu0 %v1081
        %1097 = vmatpush.bf16.msra.mxu0 %v1080
        %1098 = vmatpush.bf16.msra.mxu0 %v1079
        %1099 = vmatpush.bf16.msra.mxu0 %v1078
        %1100 = vmatpush.bf16.msra.mxu0 %v1077
        %1101 = vmatmul.bf16.gmra.mxu0 %v1024
        %v1102 = vpop.f32.mrf.mxu0
        %v1103 = vadd.f32 %v1043, %v1102
        %v1104 = vpop.f32.mrf.mxu0
        %1105 = vdwg.mxu0
        %v1106 = vtanh.pop %v1103
        %1107 = vst.msk [vmem:[%s427] sm:$0xff] %vm454, %v1106
        %s1108 = sand.u32 %s271, 1
        %s1109 = scalar_lea.sflag [#allocation4], %s1108
        %s1110 = sand.u32 %s271, 1
        %s1111 = smul.addr %s1110, 8
        %s1112 = scalar_lea.vmem [#allocation8], %s1111
        // Predicated region
        $region77: #{encoder_client_emb_forward.1} parent=63 // pred_check
          %p1113 = pneg %p281
        $region78: #{encoder_client_emb_forward.1} parent=63 // pred_check_branch
          %1115 = sbr.rel (%p1113) target = $region80
        $region79: #{encoder_client_emb_forward.1} parent=63 // pred_region
          %1117 = vsyncadd %s1109, 0
          %s1118 = smul.addr %s27, 8
          %s1119 = scalar_lea.hbm %s11, %s1118
          %s1121 = sshll.u32 %s1112, 4
          %s1122 = int_to_ptr.vmem [resolvable:$true] %s1121
          %s1123 = sshll.u32 %s1119, 4
          %s1124 = int_to_ptr.hbm [resolvable:$true] %s1123
          %1126 = dma.vmem_to_hbm [thread:$0]  %s1122, 128, %s1124, %s1109
        $region80: #{encoder_client_emb_forward.1} parent=63 // pred_fallthru
          _
      $region64: #{encoder_client_emb_forward.1} parent=5 // pred_fallthru
        _
      %p1127 = scmp.le.s32.totalorder 2, %s22
      // Predicated region
      $region81: #{encoder_client_emb_forward.1} parent=5 // pred_check
        %p1128 = pneg %p1127
      $region82: #{encoder_client_emb_forward.1} parent=5 // pred_check_branch
        %1130 = sbr.rel (%p1128) target = $region84
      $region83: #{encoder_client_emb_forward.1} parent=5 // pred_region
        %s1131 = ssub.s32 %s22, 2
        // Predicated region
        $region85: #{encoder_client_emb_forward.1} parent=83 // pred_check
          %p1132 = pneg %p287
        $region86: #{encoder_client_emb_forward.1} parent=83 // pred_check_branch
          %1134 = sbr.rel (%p1132) target = $region88
        $region87: #{encoder_client_emb_forward.1} parent=83 // pred_region
          %s1135 = sand.u32 %s272, 1
          %s1136 = scalar_lea.sflag [#allocation4], %s1135
          %s1137 = sand.u32 %s272, 1
          %s1138 = smul.addr %s1137, 8
          %s1139 = scalar_lea.vmem [#allocation8], %s1138
          %1141 = dma.done %s1136, 128
        $region88: #{encoder_client_emb_forward.1} parent=83 // pred_fallthru
          _
      $region84: #{encoder_client_emb_forward.1} parent=5 // pred_fallthru
        _
    $region6: #{encoder_client_emb_forward.1} parent=1 // loop_footer
      %s26 = sadd.s32 1, %s22
    $region7: #{encoder_client_emb_forward.1} parent=1 // loop_footer_branch
      %21 = sbr.rel target = $region3
    $region8: #{encoder_client_emb_forward.1} parent=1 // loop_exit
      _
    %1142 = vsyncpa [#allocation3], 1
    %s1143 = scalar_lea.sflag [#allocation3], 1
    %1144 = vsyncpa %s1143, 1
    %1145 = vsyncpa [#allocation6], 1
    %1146 = vsyncpa [#allocation4], 1
    %s1147 = scalar_lea.sflag [#allocation4], 1
    %1148 = vsyncpa %s1147, 1

</llo_original>
